<compile_context>
chip_gen: v6e
topology: v6e:2x2x1
jax: 0.10.0
libtpu: 0.0.40
codegen_flags: <defaults>
</compile_context>

<pallas_src>
import jax
import jax.numpy as jnp
from jax.experimental import pallas as pl
from jax.experimental.pallas import tpu as pltpu  # noqa: F401  (TPU backend)

B = 8                               # forced by ones(100, 8) @ x in the forward
IMG = (1, 4, 4)                     # image_size -> in_planes = 16
IN_PLANES = IMG[0] * IMG[1] * IMG[2]
HIDDEN = 100                        # Linear(in_planes, 100); 100 == 10*10


def _full_spec(shape):
    # whole array as a single block (block_shape == array shape, no grid)
    return pl.BlockSpec(shape, lambda: (0,) * len(shape))


def fused_forward_kernel(x_ref, wl_ref, bl_ref, w1_ref, b1_ref, o_ref):
    # ---- Linear(16 -> 100) + ReLU  (relu(F.relu(.)) collapsed to one relu) ----
    h = jnp.dot(x_ref[...], wl_ref[...], preferred_element_type=jnp.float32)
    h = jnp.maximum(h + bl_ref[...], 0.0)                         # (B, HIDDEN)

    # ---- elementwise chain (matches the reference, minus the duplicate relu) ----
    t = h + h
    t = t + 2.0
    t = t * t
    t = t * 2.0
    t = t - t
    t = t - 2.0                                                   # (B, HIDDEN)

    # ---- view(B,1,10,10) + AdaptiveAvgPool2d((1,1)) == mean over 100 feats ----
    pooled = jnp.sum(t, axis=1, keepdims=True) * (1.0 / HIDDEN)   # (B, 1)

    # ---- Conv1d(1, 100, k=1) on (B,1,1): w*x + b, viewed as (B, 100) ----
    c1 = pooled * w1_ref[...] + b1_ref[...]                       # (B, HIDDEN)

    # ---- ones(100, 8) @ c1: every row equals the per-feature batch sum s ----
    s = jnp.sum(c1, axis=0, keepdims=True)                        # (1, HIDDEN)

    # ---- bmm(m, m) with m[i, :] == s  =>  out[0, i, j] = (sum_k s[k]) * s[j] ----
    total = jnp.sum(s, axis=1, keepdims=True)                     # (1, 1)
    out2d = jnp.broadcast_to(total * s, (HIDDEN, HIDDEN))         # (100, 100)
    o_ref[...] = out2d.reshape(1, HIDDEN, HIDDEN)                 # (1, 100, 100)


@jax.jit
def toy_custom_fn_forward(x, params):
    w_lin, b_lin, w1d, b1d = params
    xf = x.reshape(x.shape[0], -1).astype(jnp.float32)            # (B, 16)
    return pl.pallas_call(
        fused_forward_kernel,
        out_shape=jax.ShapeDtypeStruct((1, HIDDEN, HIDDEN), jnp.float32),
        in_specs=[_full_spec((B, IN_PLANES)),
                  _full_spec((IN_PLANES, HIDDEN)),
                  _full_spec((1, HIDDEN)),
                  _full_spec((1, HIDDEN)),
                  _full_spec((1, HIDDEN))],
        out_specs=_full_spec((1, HIDDEN, HIDDEN)),
    )(xf, w_lin, b_lin, w1d, b1d)


def reference_forward(x, params):
    """Pure-JAX reference mirroring the PyTorch forward, for verification."""
    w_lin, b_lin, w1d, b1d = params
    h = x.reshape(x.shape[0], -1) @ w_lin + b_lin
    h = jnp.maximum(h, 0.0)
    h = jnp.maximum(h, 0.0)
    h = h + h
    h = h + 2.0
    h = h * h
    h = h * 2.0
    h = h - h
    h = h - 2.0
    x4 = h.reshape(B, 1, 10, 10)
    # y = conv2d(x4) is dead code in the reference forward (never used)
    pooled = jnp.mean(x4, axis=(2, 3))              # AdaptiveAvgPool2d -> (B, 1)
    c1 = pooled * w1d + b1d                         # conv1d(k=1) -> (B, 100)
    m = jnp.ones((HIDDEN, B), jnp.float32) @ c1     # (100, 100)
    m = m.reshape(1, HIDDEN, HIDDEN)
    return jnp.einsum("bij,bjk->bik", m, m)


if __name__ == "__main__":
    key = jax.random.PRNGKey(0)
    k = jax.random.split(key, 5)
    x = jax.random.normal(k[0], (B,) + IMG, dtype=jnp.float32)

    # Deterministic parameter init (uniform, torch-style fan-in bounds).
    lin_bound = 1.0 / (IN_PLANES ** 0.5)
    w_lin = jax.random.uniform(k[1], (IN_PLANES, HIDDEN), jnp.float32,
                               -lin_bound, lin_bound)            # Linear weight^T
    b_lin = jax.random.uniform(k[2], (1, HIDDEN), jnp.float32,
                               -lin_bound, lin_bound)
    w1d = jax.random.uniform(k[3], (1, HIDDEN), jnp.float32, -1.0, 1.0)  # conv1d w
    b1d = jax.random.uniform(k[4], (1, HIDDEN), jnp.float32, -1.0, 1.0)  # conv1d b
    params = (w_lin, b_lin, w1d, b1d)

    out = jax.block_until_ready(toy_custom_fn_forward(x, params))
    ref = reference_forward(x, params)

    assert out.shape == (1, HIDDEN, HIDDEN), out.shape
    assert jnp.allclose(out, ref, rtol=1e-4, atol=1e-4), "mismatch vs reference"
    print("KERNEL_OK")
</pallas_src>

<mosaic_0001>
module attributes {stable_mosaic.version = 11 : i64} {
  func.func @fused_forward_kernel(%arg0: memref<8x16xf32, #tpu.memory_space<vmem>>, %arg1: memref<16x100xf32, #tpu.memory_space<vmem>>, %arg2: memref<1x100xf32, #tpu.memory_space<vmem>>, %arg3: memref<1x100xf32, #tpu.memory_space<vmem>>, %arg4: memref<1x100xf32, #tpu.memory_space<vmem>>, %arg5: memref<1x100x100xf32, #tpu.memory_space<vmem>>) attributes {dimension_semantics = [], scalar_prefetch = 0 : i64, scratch_operands = 0 : i64, tpu.core_type = #tpu.core_type<tc>} {
    %c0 = arith.constant 0 : index
    %c0_0 = arith.constant 0 : index
    %0 = vector.load %arg0[%c0, %c0_0] : memref<8x16xf32, #tpu.memory_space<vmem>>, vector<8x16xf32>
    %c0_1 = arith.constant 0 : index
    %c0_2 = arith.constant 0 : index
    %1 = vector.load %arg1[%c0_1, %c0_2] : memref<16x100xf32, #tpu.memory_space<vmem>>, vector<16x100xf32>
    %cst = arith.constant dense<0.000000e+00> : vector<8x100xf32>
    %2 = tpu.matmul %0, %1, %cst {dimension_numbers = #tpu.dot_dimension_numbers<[1], [0], [0], [1], [0, 0, 1, 1], [], []>} : vector<8x16xf32>, vector<16x100xf32>, vector<8x100xf32> -> vector<8x100xf32>
    %c0_3 = arith.constant 0 : index
    %c0_4 = arith.constant 0 : index
    %3 = vector.load %arg2[%c0_3, %c0_4] : memref<1x100xf32, #tpu.memory_space<vmem>>, vector<1x100xf32>
    %4 = vector.broadcast %3 : vector<1x100xf32> to vector<8x100xf32>
    %5 = arith.addf %2, %4 : vector<8x100xf32>
    %cst_5 = arith.constant 0.000000e+00 : f32
    %6 = vector.broadcast %cst_5 : f32 to vector<8x100xf32>
    %7 = arith.maximumf %5, %6 : vector<8x100xf32>
    %8 = arith.addf %7, %7 : vector<8x100xf32>
    %cst_6 = arith.constant 2.000000e+00 : f32
    %9 = vector.broadcast %cst_6 : f32 to vector<8x100xf32>
    %10 = arith.addf %8, %9 : vector<8x100xf32>
    %11 = arith.mulf %10, %10 : vector<8x100xf32>
    %cst_7 = arith.constant 2.000000e+00 : f32
    %12 = vector.broadcast %cst_7 : f32 to vector<8x100xf32>
    %13 = arith.mulf %11, %12 : vector<8x100xf32>
    %14 = arith.subf %13, %13 : vector<8x100xf32>
    %cst_8 = arith.constant 2.000000e+00 : f32
    %15 = vector.broadcast %cst_8 : f32 to vector<8x100xf32>
    %16 = arith.subf %14, %15 : vector<8x100xf32>
    %cst_9 = arith.constant dense<0.000000e+00> : vector<8xf32>
    %17 = vector.multi_reduction <add>, %16, %cst_9 [1] : vector<8x100xf32> to vector<8xf32>
    %18 = vector.shape_cast %17 : vector<8xf32> to vector<8x1xf32>
    %cst_10 = arith.constant 0.00999999977 : f32
    %19 = vector.broadcast %cst_10 : f32 to vector<8x1xf32>
    %20 = arith.mulf %18, %19 : vector<8x1xf32>
    %c0_11 = arith.constant 0 : index
    %c0_12 = arith.constant 0 : index
    %21 = vector.load %arg3[%c0_11, %c0_12] : memref<1x100xf32, #tpu.memory_space<vmem>>, vector<1x100xf32>
    %22 = vector.broadcast %20 : vector<8x1xf32> to vector<8x100xf32>
    %23 = vector.broadcast %21 : vector<1x100xf32> to vector<8x100xf32>
    %24 = arith.mulf %22, %23 : vector<8x100xf32>
    %c0_13 = arith.constant 0 : index
    %c0_14 = arith.constant 0 : index
    %25 = vector.load %arg4[%c0_13, %c0_14] : memref<1x100xf32, #tpu.memory_space<vmem>>, vector<1x100xf32>
    %26 = vector.broadcast %25 : vector<1x100xf32> to vector<8x100xf32>
    %27 = arith.addf %24, %26 : vector<8x100xf32>
    %cst_15 = arith.constant dense<0.000000e+00> : vector<100xf32>
    %28 = vector.multi_reduction <add>, %27, %cst_15 [0] : vector<8x100xf32> to vector<100xf32>
    %29 = vector.shape_cast %28 : vector<100xf32> to vector<1x100xf32>
    %cst_16 = arith.constant dense<0.000000e+00> : vector<1xf32>
    %30 = vector.multi_reduction <add>, %29, %cst_16 [1] : vector<1x100xf32> to vector<1xf32>
    %31 = vector.shape_cast %30 : vector<1xf32> to vector<1x1xf32>
    %32 = vector.broadcast %31 : vector<1x1xf32> to vector<1x100xf32>
    %33 = arith.mulf %32, %29 : vector<1x100xf32>
    %34 = vector.shape_cast %33 : vector<1x100xf32> to vector<1x100xf32>
    %35 = vector.broadcast %34 : vector<1x100xf32> to vector<100x100xf32>
    %36 = vector.shape_cast %35 : vector<100x100xf32> to vector<1x100x100xf32>
    %c0_17 = arith.constant 0 : index
    %c0_18 = arith.constant 0 : index
    %c0_19 = arith.constant 0 : index
    %37 = vector.load %arg5[%c0_17, %c0_18, %c0_19] : memref<1x100x100xf32, #tpu.memory_space<vmem>>, vector<1x100x100xf32>
    tpu.vector_store %arg5[%c0_17, %c0_18, %c0_19], %36 {strides = array<i32>} : memref<1x100x100xf32, #tpu.memory_space<vmem>>, vector<1x100x100xf32>,
    return
  }
}

</mosaic_0001>

<llo_original>
// kernel: toy_custom_fn_forward.1
$region0: #{toy_custom_fn_forward.1}
  #allocation0 [shape = 'u32[]', space=smem, size = 0x4, offset = 0x4, fixed_abs, tag = 'smem constant byte address 0x4 - core index']
  #allocation1 [shape = 'u32[144,128]{1,0:T(1,128)}', space=vmem, size = 0x12000, scoped, tag = 'internal scratch']
  %s0 = inlined_call_operand.vmem [shape: f32[8,16], index: 0, kind: input, shape index: {}]
  %s1 = inlined_call_operand.vmem [shape: f32[16,100], index: 1, kind: input, shape index: {}]
  %s2 = inlined_call_operand.vmem [shape: f32[1,100], index: 2, kind: input, shape index: {}]
  %s3 = inlined_call_operand.vmem [shape: f32[1,100], index: 3, kind: input, shape index: {}]
  %s4 = inlined_call_operand.vmem [shape: f32[1,100], index: 4, kind: input, shape index: {}]
  %s5 = inlined_call_operand.vmem [shape: f32[1,100,100], index: 5, kind: output, shape index: {}]
  %s6 = sld [smem:[#allocation0]]
  $region30: #{toy_custom_fn_forward.1} parent=0
    _
  %s8 = ssub.s32 1, %s6
  %s9 = scalar_select 0, %s8, %s6
  // Predicated region
  $region2: #{toy_custom_fn_forward.1} parent=0 // pred_check
    _
  $region3: #{toy_custom_fn_forward.1} parent=0 // pred_check_branch
    %11 = sbr.rel (0) target = $region5
  $region4: #{toy_custom_fn_forward.1} parent=0 // pred_region
    _
  $region5: #{toy_custom_fn_forward.1} parent=0 // pred_fallthru
    _
  // Predicated region
  $region6: #{toy_custom_fn_forward.1} parent=0 // pred_check
    _
  $region7: #{toy_custom_fn_forward.1} parent=0 // pred_check_branch
    %13 = sbr.rel (0) target = $region9
  $region8: #{toy_custom_fn_forward.1} parent=0 // pred_region
    _
  $region9: #{toy_custom_fn_forward.1} parent=0 // pred_fallthru
    _
  // Predicated region
  $region10: #{toy_custom_fn_forward.1} parent=0 // pred_check
    _
  $region11: #{toy_custom_fn_forward.1} parent=0 // pred_check_branch
    %15 = sbr.rel (0) target = $region13
  $region12: #{toy_custom_fn_forward.1} parent=0 // pred_region
    _
  $region13: #{toy_custom_fn_forward.1} parent=0 // pred_fallthru
    _
  // Predicated region
  $region14: #{toy_custom_fn_forward.1} parent=0 // pred_check
    _
  $region15: #{toy_custom_fn_forward.1} parent=0 // pred_check_branch
    %17 = sbr.rel (0) target = $region17
  $region16: #{toy_custom_fn_forward.1} parent=0 // pred_region
    _
  $region17: #{toy_custom_fn_forward.1} parent=0 // pred_fallthru
    _
  // Predicated region
  $region18: #{toy_custom_fn_forward.1} parent=0 // pred_check
    _
  $region19: #{toy_custom_fn_forward.1} parent=0 // pred_check_branch
    %19 = sbr.rel (0) target = $region21
  $region20: #{toy_custom_fn_forward.1} parent=0 // pred_region
    _
  $region21: #{toy_custom_fn_forward.1} parent=0 // pred_fallthru
    _
  %v20 = vld [vmem:[%s0] sm:$0xff]
  %v21 = vld [vmem:[%s1] sm:$0xff]
  %v22 = vld [vmem:[%s1 + $0x8] sm:$0xff]
  %v23 = vld [vmem:[%s2] sm:$0x1]
  %v25 = vlaneseq
  %v26 = vshrl.u32 %v25, 7
  %v27 = vsub.s32 0, %v26
  %v28 = vrot.slane %v23, %v27
  %vm30 = vcmask 130048
  %v32 = vsel %vm30, %v20, 0
  %34 = vmatprep.subr.mxu0 0.0
  %35 = vmatpush1.msra.mxu0 0.0
  %36 = vmatprep.subr.mxu0 0.0
  %37 = vmatpush1.msra.mxu0 0.0
  %38 = vmatprep.subr.mxu0 0.0
  %39 = vmatpush1.msra.mxu0 0.0
  %40 = vmatprep.subr.mxu0 0.0
  %41 = vmatpush1.msra.mxu0 0.0
  %42 = vmatprep.subr.mxu0 0.0
  %43 = vmatpush1.msra.mxu0 0.0
  %44 = vmatprep.subr.mxu0 0.0
  %45 = vmatpush1.msra.mxu0 0.0
  %46 = vmatprep.subr.mxu0 0.0
  %47 = vmatpush1.msra.mxu0 0.0
  %48 = vmatprep.subr.mxu0 0.0
  %49 = vmatpush1.msra.mxu0 0.0
  %50 = vmatprep.subr.mxu0 0.0
  %51 = vmatpush1.msra.mxu0 0.0
  %52 = vmatprep.subr.mxu0 0.0
  %53 = vmatpush1.msra.mxu0 0.0
  %54 = vmatprep.subr.mxu0 0.0
  %55 = vmatpush1.msra.mxu0 0.0
  %56 = vmatprep.subr.mxu0 0.0
  %57 = vmatpush1.msra.mxu0 0.0
  %58 = vmatprep.subr.mxu0 0.0
  %59 = vmatpush1.msra.mxu0 0.0
  %60 = vmatprep.subr.mxu0 0.0
  %61 = vmatpush1.msra.mxu0 0.0
  %62 = vmatprep.subr.mxu0 0.0
  %63 = vmatpush1.msra.mxu0 %v22
  %64 = vmatprep.subr.mxu0 0.0
  %65 = vmatpush1.msra.mxu0 %v21
  %66 = vmatprep.subr.mxu0 0.0
  %67 = vmatpush2.msra.mxu0 0.0
  %68 = vmatprep.subr.mxu0 0.0
  %69 = vmatpush2.msra.mxu0 0.0
  %70 = vmatprep.subr.mxu0 0.0
  %71 = vmatpush2.msra.mxu0 0.0
  %72 = vmatprep.subr.mxu0 0.0
  %73 = vmatpush2.msra.mxu0 0.0
  %74 = vmatprep.subr.mxu0 0.0
  %75 = vmatpush2.msra.mxu0 0.0
  %76 = vmatprep.subr.mxu0 0.0
  %77 = vmatpush2.msra.mxu0 0.0
  %78 = vmatprep.subr.mxu0 0.0
  %79 = vmatpush2.msra.mxu0 0.0
  %80 = vmatprep.subr.mxu0 0.0
  %81 = vmatpush2.msra.mxu0 0.0
  %82 = vmatprep.subr.mxu0 0.0
  %83 = vmatpush2.msra.mxu0 0.0
  %84 = vmatprep.subr.mxu0 0.0
  %85 = vmatpush2.msra.mxu0 0.0
  %86 = vmatprep.subr.mxu0 0.0
  %87 = vmatpush2.msra.mxu0 0.0
  %88 = vmatprep.subr.mxu0 0.0
  %89 = vmatpush2.msra.mxu0 0.0
  %90 = vmatprep.subr.mxu0 0.0
  %91 = vmatpush2.msra.mxu0 0.0
  %92 = vmatprep.subr.mxu0 0.0
  %93 = vmatpush2.msra.mxu0 0.0
  %94 = vmatprep.subr.mxu0 0.0
  %95 = vmatpush2.msra.mxu0 0.0
  %96 = vmatprep.subr.mxu0 0.0
  %97 = vmatpush2.msra.mxu0 0.0
  %98 = vmatprep.mubr.f32.mxu0 0.0
  %99 = vmatmul.mubr.f32.gmra.mxu0 %v32
  %v100 = vpop.f32.mrf.mxu0
  %v101 = vadd.f32 %v28, %v100
  %v102 = vpop.f32.mrf.mxu0
  %103 = vdwg.mxu0
  %v104 = vmax.f32 %v101, 0.0
  %v105 = vadd.f32 %v104, %v104
  %v106 = vadd.f32 %v105, 2.0
  %v107 = vmul.f32 %v106, %v106
  %v108 = vmul.f32 %v107, 2.0
  %v109 = vsub.f32 %v108, %v108
  %v110 = vsub.f32 %v109, 2.0
  %vm111 = vcmask 818176
  %v112 = vsel %vm111, %v110, 0.0
  %113 = vadd.xlane.f32.xlu0 %v112
  %v114 = vpop.xlane.xlu0 %113
  %v115 = vmul.f32 %v114, 0.01
  %v116 = vld [vmem:[%s3] sm:$0x1]
  %v118 = vlaneseq
  %v119 = vshrl.u32 %v118, 7
  %v120 = vsub.s32 0, %v119
  %v121 = vrot.slane %v116, %v120
  %v123 = vmul.f32 %v115, %v121
  %v124 = vld [vmem:[%s4] sm:$0x1]
  %v126 = vlaneseq
  %v127 = vshrl.u32 %v126, 7
  %v128 = vsub.s32 0, %v127
  %v129 = vrot.slane %v124, %v128
  %v131 = vadd.f32 %v123, %v129
  %v132 = vsel %vm111, %v131, 0.0
  %v133 = vrot.slane %v132, 4
  %v134 = vadd.f32 %v132, %v133
  %v135 = vrot.slane %v134, 2
  %v136 = vadd.f32 %v134, %v135
  %v137 = vrot.slane %v136, 1
  %v138 = vadd.f32 %v136, %v137
  %v139 = vsel %vm111, %v138, 0.0
  %140 = vadd.xlane.f32.xlu0 %v139
  %v141 = vpop.xlane.xlu0 %140
  %v142 = vmul.f32 %v141, %v138
  %143 = vst.msk [vmem:[%s5] sm:$0xff] %vm111, %v142
  %144 = vst.msk [vmem:[%s5 + $0x8] sm:$0xff] %vm111, %v142
  %145 = vst.msk [vmem:[%s5 + $0x10] sm:$0xff] %vm111, %v142
  %146 = vst.msk [vmem:[%s5 + $0x18] sm:$0xff] %vm111, %v142
  %147 = vst.msk [vmem:[%s5 + $0x20] sm:$0xff] %vm111, %v142
  %148 = vst.msk [vmem:[%s5 + $0x28] sm:$0xff] %vm111, %v142
  %149 = vst.msk [vmem:[%s5 + $0x30] sm:$0xff] %vm111, %v142
  %150 = vst.msk [vmem:[%s5 + $0x38] sm:$0xff] %vm111, %v142
  %151 = vst.msk [vmem:[%s5 + $0x40] sm:$0xff] %vm111, %v142
  %152 = vst.msk [vmem:[%s5 + $0x48] sm:$0xff] %vm111, %v142
  %153 = vst.msk [vmem:[%s5 + $0x50] sm:$0xff] %vm111, %v142
  %154 = vst.msk [vmem:[%s5 + $0x58] sm:$0xff] %vm111, %v142
  %vm155 = vcmask 814080
  %156 = vst.msk [vmem:[%s5 + $0x60] sm:$0xf] %vm155, %v142
  // Predicated region
  $region22: #{toy_custom_fn_forward.1} parent=0 // pred_check
    _
  $region23: #{toy_custom_fn_forward.1} parent=0 // pred_check_branch
    %158 = sbr.rel (0) target = $region25
  $region24: #{toy_custom_fn_forward.1} parent=0 // pred_region
    _
  $region25: #{toy_custom_fn_forward.1} parent=0 // pred_fallthru
    _
  // Predicated region
  $region26: #{toy_custom_fn_forward.1} parent=0 // pred_check
    _
  $region27: #{toy_custom_fn_forward.1} parent=0 // pred_check_branch
    %160 = sbr.rel (0) target = $region29
  $region28: #{toy_custom_fn_forward.1} parent=0 // pred_region
    _
  $region29: #{toy_custom_fn_forward.1} parent=0 // pred_fallthru
    _

</llo_original>
